<compile_context>
chip_gen: v7x
topology: tpu7x:2x2x1
jax: 0.10.0
libtpu: 0.0.40
codegen_flags: <defaults>
</compile_context>

<pallas_src>
import functools

import jax
import jax.numpy as jnp
import numpy as np
from jax import lax
from jax.experimental import pallas as pl
from jax.experimental.pallas import tpu as pltpu


def _round_up(x, m):
    return ((x + m - 1) // m) * m


# --------------------- pass 1: per-class stats + staged loss_ce ---------------
def _stats_kernel(logits_ref, tgtc_ref, tgtr_ref, stats_ref, lce_ref, *,
                  n_valid, tile_n, tiles_per_core, transposed_dot):
    ci = pl.program_id(0)          # core-slice index ("parallel")
    it = pl.program_id(1)          # tile index within the slice ("arbitrary")

    @pl.when(it == 0)
    def _init():
        stats_ref[...] = jnp.zeros_like(stats_ref)

    tile_idx = ci * tiles_per_core + it
    logits = logits_ref[...].astype(jnp.float32)              # (TN, C)
    tn, c = logits.shape
    tgt = tgtc_ref[...]                                        # (TN, 1) int32

    row_ids = lax.broadcasted_iota(jnp.int32, (tn, 1), 0) + tile_idx * tile_n
    valid_b = row_ids < n_valid                                # (TN, 1) bool
    valid = valid_b.astype(jnp.float32)
    # zero invalid (partial-block) rows so exp/log never see garbage
    logits = jnp.where(valid_b, logits, 0.0)

    class_col = lax.broadcasted_iota(jnp.int32, (tn, c), 1)
    onehot = (class_col == tgt).astype(jnp.float32)            # (TN, C)

    # analytic log-softmax (no log(probs + eps) pass)
    m = jnp.max(logits, axis=1, keepdims=True)                 # (TN, 1)
    x = logits - m
    e = jnp.exp(x)
    s = jnp.sum(e, axis=1, keepdims=True)
    log_s = jnp.log(s)
    logit_t = jnp.sum(onehot * logits, axis=1, keepdims=True)
    loss_ce = (m + log_s) - logit_t                            # (TN, 1) = -log p_t
    ent = log_s - jnp.sum(e * x, axis=1, keepdims=True) / s    # (TN, 1)

    # stage per-sample loss_ce so pass 2 never touches the logits again
    lce_ref[...] = loss_ce

    # per-class segment sums [count | sum loss_ce | sum ent] on the MXU
    feats = jnp.concatenate([valid, loss_ce * valid, ent * valid], axis=1)  # (TN,3)
    if transposed_dot:
        # (TN,3)^T (x) (TN,C) -> (3,C): single one-hot, lane-dense accumulator
        sums = lax.dot_general(feats, onehot, (((0,), (0,)), ((), ())),
                               preferred_element_type=jnp.float32)          # (3, C)
    else:
        # fallback: explicit transposed one-hot (previously validated lowering)
        class_row = lax.broadcasted_iota(jnp.int32, (c, tn), 0)
        onehot_t = (class_row == tgtr_ref[...]).astype(jnp.float32)         # (C, TN)
        sums = jnp.dot(onehot_t, feats, preferred_element_type=jnp.float32)  # (C, 3)
    stats_ref[...] += sums[None]


# ------------------ pass 2: per-sample weighted focal loss --------------------
def _loss_kernel(lce_ref, tgt_ref, table_ref, out_ref, *,
                 n_valid, tile_n, tiles_per_core, gamma0, alpha_r, tau, lam, eps):
    ci = pl.program_id(0)
    it = pl.program_id(1)

    @pl.when(it == 0)
    def _init():
        out_ref[...] = jnp.zeros_like(out_ref)

    tile_idx = ci * tiles_per_core + it
    tn = lce_ref.shape[0]
    c = table_ref.shape[0]

    row_ids = lax.broadcasted_iota(jnp.int32, (tn, 1), 0) + tile_idx * tile_n
    valid_b = row_ids < n_valid
    valid = valid_b.astype(jnp.float32)
    lce = jnp.where(valid_b, lce_ref[...], 0.0)                # (TN, 1)

    # gather all four per-class quantities with a single MXU matmul
    tgt = tgt_ref[...]                                          # (TN, 1)
    class_col = lax.broadcasted_iota(jnp.int32, (tn, c), 1)
    onehot = (class_col == tgt).astype(jnp.float32)             # (TN, C)
    g = jnp.dot(onehot, table_ref[...], preferred_element_type=jnp.float32)  # (TN,4)
    avg_c = g[:, 0:1]
    w_ent_t = g[:, 1:2]
    w_rl = g[:, 2:3]
    head = g[:, 3:4] > 0.5

    gamma_i = gamma0 * lce / (avg_c + eps)

    w_sp = jnp.where(lce < lam, 0.0, 1.0)
    redundant = (lce < tau) & (lce >= lam) & head
    w_sp = jnp.where(redundant, alpha_r, w_sp)

    p_t = jnp.exp(-lce)
    one_m_pt = jnp.maximum(1.0 - p_t, 1e-30)        # guards 0 * log(0) = NaN
    focal = jnp.exp(gamma_i * jnp.log(one_m_pt))    # (1 - p_t) ** gamma_i

    w_comb = (w_sp + eps) * (w_ent_t + eps) * (w_rl + eps)
    # elementwise accumulate into the resident (tile_n,1) block; reduce in XLA
    out_ref[...] += valid * w_comb * focal * lce


# --------------------------------- wrapper ------------------------------------
def _pick_tile(n, c):
    """Row tile: multiple of 128 with an f32 logits tile <= ~2 MiB, so the
    double-buffered working set stays comfortably inside 32 MiB scoped VMEM on
    every generation (v5e/v6e could go bigger; v7x only has 64 MiB physical)."""
    n8 = _round_up(max(int(n), 1), 8)
    if n8 <= 128:
        return n8                                   # one exact block, no padding
    cap_rows = _round_up(n, 128)
    budget = 2 * 1024 * 1024
    for cand in (1024, 512, 256):
        if cand <= cap_rows and cand * c * 4 <= budget:
            return cand
    # TODO(synk): tile the class axis too (online logZ) for very large C.
    return 128


def rl_hybrid_sp_focal_loss(logits, targets, epoch,
                            class_loss_avg, class_entropy_avg, class_rl_weight,
                            head_class_mask,
                            gamma0=2.0, alpha_r=0.1, tau=0.2, lambda_max=1.0,
                            total_epochs=200, ema_decay=0.9, eps=1e-6):
    n, c = logits.shape
    # epoch is a static Python number (same as the torch API).
    lam = float(lambda_max) * min(1.0, float(epoch) / float(total_epochs))

    tile_n = _pick_tile(n, c)
    n_real = -(-n // tile_n)                         # number of real row tiles
    # split the batch across TensorCores only when it divides evenly (avoids
    # padded grid steps on single-core chips).  TODO(synk): odd tile counts.
    n_cores = 2 if (n_real >= 2 and n_real % 2 == 0) else 1
    tpc = n_real // n_cores
    n_staged = n_real * tile_n                       # staged loss_ce rows (>= n)

    targets = targets.reshape(-1).astype(jnp.int32)
    tgt_col = targets.reshape(n, 1)
    tgt_row = targets.reshape(1, n)

    cparams = pltpu.CompilerParams(
        dimension_semantics=("parallel", "arbitrary"),
        vmem_limit_bytes=32 * 1024 * 1024)

    # ---- pass 1: per-class segment sums + staged per-sample loss_ce ----
    def run_stats(transposed):
        kern = functools.partial(
            _stats_kernel, n_valid=n, tile_n=tile_n, tiles_per_core=tpc,
            transposed_dot=transposed)
        stats_shape = (n_cores, 3, c) if transposed else (n_cores, c, 3)
        stats_block = (1, 3, c) if transposed else (1, c, 3)
        return pl.pallas_call(
            kern,
            out_shape=(jax.ShapeDtypeStruct(stats_shape, jnp.float32),
                       jax.ShapeDtypeStruct((n_staged, 1), jnp.float32)),
            grid_spec=pltpu.PrefetchScalarGridSpec(
                num_scalar_prefetch=0,
                grid=(n_cores, tpc),
                in_specs=[
                    pl.BlockSpec((tile_n, c), lambda ci, i: (ci * tpc + i, 0)),
                    pl.BlockSpec((tile_n, 1), lambda ci, i: (ci * tpc + i, 0)),
                    pl.BlockSpec((1, tile_n), lambda ci, i: (0, ci * tpc + i)),
                ],
                out_specs=(
                    pl.BlockSpec(stats_block, lambda ci, i: (ci, 0, 0)),
                    pl.BlockSpec((tile_n, 1), lambda ci, i: (ci * tpc + i, 0)),
                ),
            ),
            compiler_params=cparams,
        )(logits, tgt_col, tgt_row)

    try:
        stats, lce = jax.block_until_ready(run_stats(True))
        sums = jnp.sum(stats, axis=0)                 # (3, C)
    except Exception:
        # TODO(synk): drop fallback once transposed-contraction lowering is a given.
        stats, lce = jax.block_until_ready(run_stats(False))
        sums = jnp.sum(stats, axis=0).T               # (C, 3) -> (3, C)

    # ---- tiny O(C) EMA / w_ent finalize + (C,4) gather table (XLA glue) ----
    counts = sums[0]
    denom = jnp.maximum(counts, 1.0)
    ce_mean = sums[1] / denom
    ent_mean = sums[2] / denom
    present = counts > 0.5
    la0 = class_loss_avg.astype(jnp.float32).reshape(c)
    ea0 = class_entropy_avg.astype(jnp.float32).reshape(c)
    new_la = jnp.where(present, ema_decay * la0 + (1.0 - ema_decay) * ce_mean, la0)
    new_ea = jnp.where(present, ema_decay * ea0 + (1.0 - ema_decay) * ent_mean, ea0)
    inv_h = 1.0 / (new_ea + eps)
    w_ent = inv_h / jnp.sum(inv_h)
    cls_table = jnp.stack(
        [new_la, w_ent,
         class_rl_weight.astype(jnp.float32).reshape(c),
         head_class_mask.astype(jnp.float32).reshape(c)], axis=1)       # (C, 4)

    # ---- pass 2: per-sample weighted focal loss (reads staged loss_ce only) ----
    loss_kernel = functools.partial(
        _loss_kernel, n_valid=n, tile_n=tile_n, tiles_per_core=tpc,
        gamma0=float(gamma0), alpha_r=float(alpha_r), tau=float(tau),
        lam=lam, eps=float(eps))
    part = pl.pallas_call(
        loss_kernel,
        out_shape=jax.ShapeDtypeStruct((n_cores * tile_n, 1), jnp.float32),
        grid_spec=pltpu.PrefetchScalarGridSpec(
            num_scalar_prefetch=0,
            grid=(n_cores, tpc),
            in_specs=[
                pl.BlockSpec((tile_n, 1), lambda ci, i: (ci * tpc + i, 0)),  # loss_ce
                pl.BlockSpec((tile_n, 1), lambda ci, i: (ci * tpc + i, 0)),  # targets
                pl.BlockSpec((c, 4), lambda ci, i: (0, 0)),                  # table
            ],
            out_specs=pl.BlockSpec((tile_n, 1), lambda ci, i: (ci, 0)),
        ),
        compiler_params=cparams,
    )(lce, tgt_col, cls_table)

    loss = jnp.sum(part) / float(n)
    return loss, new_la, new_ea


# ------------------------- numpy reference (torch spec) ----------------------
def _reference(logits, targets, epoch, loss_avg, ent_avg, rl_w, head_vec,
               gamma0, alpha_r, tau, lambda_max, total_epochs, ema_decay, eps):
    logits = np.asarray(logits, np.float32)
    targets = np.asarray(targets)
    n, _ = logits.shape
    x = logits - logits.max(1, keepdims=True)
    probs = np.exp(x) / np.exp(x).sum(1, keepdims=True)
    p_t = probs[np.arange(n), targets]
    loss_ce = -np.log(p_t + eps)
    ent = -(probs * np.log(probs + eps)).sum(1)
    loss_avg = np.asarray(loss_avg, np.float32).copy()
    ent_avg = np.asarray(ent_avg, np.float32).copy()
    for cc in np.unique(targets):
        mask = targets == cc
        loss_avg[cc] = ema_decay * loss_avg[cc] + (1 - ema_decay) * loss_ce[mask].mean()
        ent_avg[cc] = ema_decay * ent_avg[cc] + (1 - ema_decay) * ent[mask].mean()
    inv_h = 1.0 / (ent_avg + eps)
    w_ent = inv_h / inv_h.sum()
    lam = lambda_max * min(1.0, epoch / total_epochs)
    avg_c = loss_avg[targets]
    gamma_i = gamma0 * (loss_ce / (avg_c + eps))
    w_sp = np.ones_like(loss_ce)
    w_sp = np.where(loss_ce < lam, 0.0, w_sp)
    head_mask = np.asarray(head_vec)[targets] > 0.5
    redundant = (loss_ce < tau) & (loss_ce >= lam) & head_mask
    w_sp = np.where(redundant, alpha_r, w_sp)
    focal = (1.0 - p_t) ** gamma_i
    w_rl = np.asarray(rl_w)[targets]
    w_comb = np.exp(np.log(w_sp + eps) + np.log(w_ent[targets] + eps) + np.log(w_rl + eps))
    loss = w_comb * focal * loss_ce
    return loss.mean(), loss_avg, ent_avg


if __name__ == "__main__":
    def run_case(N, C, head_classes, epoch, total_epochs):
        key = jax.random.PRNGKey(0)
        k1, k2 = jax.random.split(key)
        logits = jax.random.normal(k1, (N, C), dtype=jnp.float32)
        targets = jax.random.randint(k2, (N,), 0, C, dtype=jnp.int32)

        class_loss_avg = jnp.zeros((C,), jnp.float32)
        class_entropy_avg = jnp.zeros((C,), jnp.float32)
        class_rl_weight = jnp.ones((C,), jnp.float32)
        head_vec = jnp.asarray([1.0 if i in head_classes else 0.0 for i in range(C)],
                               jnp.float32)

        loss, new_la, new_ea = rl_hybrid_sp_focal_loss(
            logits, targets, epoch,
            class_loss_avg, class_entropy_avg, class_rl_weight, head_vec,
            total_epochs=total_epochs)
        jax.block_until_ready(loss)

        ref_loss, ref_la, ref_ea = _reference(
            np.array(logits), np.array(targets), epoch,
            np.array(class_loss_avg), np.array(class_entropy_avg),
            np.array(class_rl_weight), np.array(head_vec),
            gamma0=2.0, alpha_r=0.1, tau=0.2, lambda_max=1.0,
            total_epochs=total_epochs, ema_decay=0.9, eps=1e-6)

        assert np.allclose(float(loss), ref_loss, rtol=5e-3, atol=1e-9), \
            (N, C, float(loss), ref_loss)
        assert np.allclose(np.array(new_la), ref_la, rtol=1e-3, atol=1e-6), (N, C)
        assert np.allclose(np.array(new_ea), ref_ea, rtol=1e-3, atol=1e-6), (N, C)

    # single exact-block case (tiny shapes, single core-slice)
    run_case(N=16, C=8, head_classes=[0, 1, 2], epoch=10, total_epochs=200)
    # single partial block (block larger than N, masking path)
    run_case(N=400, C=128, head_classes=list(range(10)), epoch=50, total_epochs=200)
    # multi-tile + dual core-slice split + partial tail block
    run_case(N=2000, C=128, head_classes=list(range(16)), epoch=120, total_epochs=200)

    print("KERNEL_OK")
</pallas_src>

<mosaic_0001>
module attributes {stable_mosaic.version = 11 : i64} {
  func.func @_stats_kernel(%arg0: i32, %arg1: i32, %arg2: memref<16x8xf32, #tpu.memory_space<vmem>>, %arg3: memref<16x1xi32, #tpu.memory_space<vmem>>, %arg4: memref<1x16xi32, #tpu.memory_space<vmem>>, %arg5: memref<1x3x8xf32, #tpu.memory_space<vmem>>, %arg6: memref<16x1xf32, #tpu.memory_space<vmem>>) attributes {dimension_semantics = [#tpu.dimension_semantics<parallel>, #tpu.dimension_semantics<arbitrary>], iteration_bounds = array<i64: 1, 1>, scalar_prefetch = 0 : i64, scratch_operands = 0 : i64, tpu.core_type = #tpu.core_type<tc>, window_params = [{transform_indices = @transform_0, window_bounds = array<i64: 16, 8>}, {transform_indices = @transform_1, window_bounds = array<i64: 16, 1>}, {transform_indices = @transform_2, window_bounds = array<i64: 1, 16>}, {transform_indices = @transform_3, window_bounds = array<i64: 1, 3, 8>}, {transform_indices = @transform_4, window_bounds = array<i64: 16, 1>}]} {
    %c0_i32 = arith.constant 0 : i32
    %0 = arith.cmpi eq, %arg1, %c0_i32 : i32
    %1 = arith.extui %0 : i1 to i32
    %c0_i32_0 = arith.constant 0 : i32
    %2 = arith.cmpi ne, %1, %c0_i32_0 : i32
    scf.if %2 {
      %cst_18 = arith.constant 0.000000e+00 : f32
      %51 = vector.broadcast %cst_18 : f32 to vector<1x3x8xf32>
      %c0_19 = arith.constant 0 : index
      %c0_20 = arith.constant 0 : index
      %c0_21 = arith.constant 0 : index
      %52 = vector.load %arg5[%c0_19, %c0_20, %c0_21] : memref<1x3x8xf32, #tpu.memory_space<vmem>>, vector<1x3x8xf32>
      tpu.vector_store %arg5[%c0_19, %c0_20, %c0_21], %51 {strides = array<i32>} : memref<1x3x8xf32, #tpu.memory_space<vmem>>, vector<1x3x8xf32>,
    } else {
    }
    %c1_i32 = arith.constant 1 : i32
    %3 = arith.muli %arg0, %c1_i32 : i32
    %4 = arith.addi %3, %arg1 : i32
    %c0 = arith.constant 0 : index
    %c0_1 = arith.constant 0 : index
    %5 = vector.load %arg2[%c0, %c0_1] : memref<16x8xf32, #tpu.memory_space<vmem>>, vector<16x8xf32>
    %c0_2 = arith.constant 0 : index
    %c0_3 = arith.constant 0 : index
    %6 = vector.load %arg3[%c0_2, %c0_3] : memref<16x1xi32, #tpu.memory_space<vmem>>, vector<16x1xi32>
    %7 = tpu.iota {dimensions = array<i32: 0>} : vector<16x1xi32>
    %c16_i32 = arith.constant 16 : i32
    %8 = arith.muli %4, %c16_i32 : i32
    %9 = vector.broadcast %8 : i32 to vector<16x1xi32>
    %10 = arith.addi %7, %9 : vector<16x1xi32>
    %c16_i32_4 = arith.constant 16 : i32
    %11 = vector.broadcast %c16_i32_4 : i32 to vector<16x1xi32>
    %12 = arith.cmpi slt, %10, %11 : vector<16x1xi32>
    %13 = arith.extui %12 : vector<16x1xi1> to vector<16x1xi32>
    %14 = arith.sitofp %13 : vector<16x1xi32> to vector<16x1xf32>
    %cst = arith.constant 0.000000e+00 : f32
    %15 = vector.shape_cast %12 : vector<16x1xi1> to vector<16x1xi1>
    %16 = vector.broadcast %15 : vector<16x1xi1> to vector<16x8xi1>
    %17 = vector.broadcast %cst : f32 to vector<16x8xf32>
    %18 = arith.select %16, %5, %17 : vector<16x8xi1>, vector<16x8xf32>
    %19 = tpu.iota {dimensions = array<i32: 1>} : vector<16x8xi32>
    %20 = vector.broadcast %6 : vector<16x1xi32> to vector<16x8xi32>
    %21 = arith.cmpi eq, %19, %20 : vector<16x8xi32>
    %22 = arith.extui %21 : vector<16x8xi1> to vector<16x8xi32>
    %23 = arith.sitofp %22 : vector<16x8xi32> to vector<16x8xf32>
    %cst_5 = arith.constant dense<0xFF800000> : vector<16xf32>
    %24 = vector.multi_reduction <maximumf>, %18, %cst_5 [1] : vector<16x8xf32> to vector<16xf32>
    %25 = vector.shape_cast %24 : vector<16xf32> to vector<16x1xf32>
    %26 = vector.broadcast %25 : vector<16x1xf32> to vector<16x8xf32>
    %27 = arith.subf %18, %26 : vector<16x8xf32>
    %28 = math.exp %27 : vector<16x8xf32>
    %cst_6 = arith.constant dense<0.000000e+00> : vector<16xf32>
    %29 = vector.multi_reduction <add>, %28, %cst_6 [1] : vector<16x8xf32> to vector<16xf32>
    %30 = vector.shape_cast %29 : vector<16xf32> to vector<16x1xf32>
    %31 = math.log %30 : vector<16x1xf32>
    %32 = arith.mulf %23, %18 : vector<16x8xf32>
    %cst_7 = arith.constant dense<0.000000e+00> : vector<16xf32>
    %33 = vector.multi_reduction <add>, %32, %cst_7 [1] : vector<16x8xf32> to vector<16xf32>
    %34 = vector.shape_cast %33 : vector<16xf32> to vector<16x1xf32>
    %35 = arith.addf %25, %31 : vector<16x1xf32>
    %36 = arith.subf %35, %34 : vector<16x1xf32>
    %37 = arith.mulf %28, %27 : vector<16x8xf32>
    %cst_8 = arith.constant dense<0.000000e+00> : vector<16xf32>
    %38 = vector.multi_reduction <add>, %37, %cst_8 [1] : vector<16x8xf32> to vector<16xf32>
    %39 = vector.shape_cast %38 : vector<16xf32> to vector<16x1xf32>
    %40 = arith.divf %39, %30 : vector<16x1xf32>
    %41 = arith.subf %31, %40 : vector<16x1xf32>
    %c0_9 = arith.constant 0 : index
    %c0_10 = arith.constant 0 : index
    %42 = vector.load %arg6[%c0_9, %c0_10] : memref<16x1xf32, #tpu.memory_space<vmem>>, vector<16x1xf32>
    tpu.vector_store %arg6[%c0_9, %c0_10], %36 {strides = array<i32>} : memref<16x1xf32, #tpu.memory_space<vmem>>, vector<16x1xf32>,
    %43 = arith.mulf %36, %14 : vector<16x1xf32>
    %44 = arith.mulf %41, %14 : vector<16x1xf32>
    %45 = tpu.concatenate %14, %43, %44 in 1 : vector<16x1xf32>, vector<16x1xf32>, vector<16x1xf32> -> vector<16x3xf32>
    %cst_11 = arith.constant dense<0.000000e+00> : vector<3x8xf32>
    %46 = tpu.matmul %45, %23, %cst_11 {dimension_numbers = #tpu.dot_dimension_numbers<[0], [0], [1], [1], [0, 1, 1, 1], [], []>} : vector<16x3xf32>, vector<16x8xf32>, vector<3x8xf32> -> vector<3x8xf32>
    %c0_12 = arith.constant 0 : index
    %c0_13 = arith.constant 0 : index
    %c0_14 = arith.constant 0 : index
    %47 = vector.load %arg5[%c0_12, %c0_13, %c0_14] : memref<1x3x8xf32, #tpu.memory_space<vmem>>, vector<1x3x8xf32>
    %48 = vector.shape_cast %46 : vector<3x8xf32> to vector<1x3x8xf32>
    %49 = arith.addf %47, %48 : vector<1x3x8xf32>
    %c0_15 = arith.constant 0 : index
    %c0_16 = arith.constant 0 : index
    %c0_17 = arith.constant 0 : index
    %50 = vector.load %arg5[%c0_15, %c0_16, %c0_17] : memref<1x3x8xf32, #tpu.memory_space<vmem>>, vector<1x3x8xf32>
    tpu.vector_store %arg5[%c0_15, %c0_16, %c0_17], %49 {strides = array<i32>} : memref<1x3x8xf32, #tpu.memory_space<vmem>>, vector<1x3x8xf32>,
    return
  }
  func.func @transform_0(%arg0: i32, %arg1: i32) -> (i32, i32) {
    %c1_i32 = arith.constant 1 : i32
    %0 = arith.muli %arg0, %c1_i32 : i32
    %1 = arith.addi %0, %arg1 : i32
    %c0_i32 = arith.constant 0 : i32
    %c0_i32_0 = arith.constant 0 : i32
    return %1, %c0_i32 : i32, i32
  }
  func.func @transform_1(%arg0: i32, %arg1: i32) -> (i32, i32) {
    %c1_i32 = arith.constant 1 : i32
    %0 = arith.muli %arg0, %c1_i32 : i32
    %1 = arith.addi %0, %arg1 : i32
    %c0_i32 = arith.constant 0 : i32
    %c0_i32_0 = arith.constant 0 : i32
    return %1, %c0_i32 : i32, i32
  }
  func.func @transform_2(%arg0: i32, %arg1: i32) -> (i32, i32) {
    %c1_i32 = arith.constant 1 : i32
    %0 = arith.muli %arg0, %c1_i32 : i32
    %1 = arith.addi %0, %arg1 : i32
    %c0_i32 = arith.constant 0 : i32
    %c0_i32_0 = arith.constant 0 : i32
    return %c0_i32, %1 : i32, i32
  }
  func.func @transform_3(%arg0: i32, %arg1: i32) -> (i32, i32, i32) {
    %c0_i32 = arith.constant 0 : i32
    %c0_i32_0 = arith.constant 0 : i32
    %c0_i32_1 = arith.constant 0 : i32
    return %arg0, %c0_i32, %c0_i32_0 : i32, i32, i32
  }
  func.func @transform_4(%arg0: i32, %arg1: i32) -> (i32, i32) {
    %c1_i32 = arith.constant 1 : i32
    %0 = arith.muli %arg0, %c1_i32 : i32
    %1 = arith.addi %0, %arg1 : i32
    %c0_i32 = arith.constant 0 : i32
    %c0_i32_0 = arith.constant 0 : i32
    return %1, %c0_i32 : i32, i32
  }
}

module attributes {stable_mosaic.version = 11 : i64} {
  func.func @_stats_kernel(%arg0: i32, %arg1: i32, %arg2: memref<16x8xf32, #tpu.memory_space<vmem>>, %arg3: memref<16x1xi32, #tpu.memory_space<vmem>>, %arg4: memref<1x16xi32, #tpu.memory_space<vmem>>, %arg5: memref<1x8x3xf32, #tpu.memory_space<vmem>>, %arg6: memref<16x1xf32, #tpu.memory_space<vmem>>) attributes {dimension_semantics = [#tpu.dimension_semantics<parallel>, #tpu.dimension_semantics<arbitrary>], iteration_bounds = array<i64: 1, 1>, scalar_prefetch = 0 : i64, scratch_operands = 0 : i64, tpu.core_type = #tpu.core_type<tc>, window_params = [{transform_indices = @transform_0, window_bounds = array<i64: 16, 8>}, {transform_indices = @transform_1, window_bounds = array<i64: 16, 1>}, {transform_indices = @transform_2, window_bounds = array<i64: 1, 16>}, {transform_indices = @transform_3, window_bounds = array<i64: 1, 8, 3>}, {transform_indices = @transform_4, window_bounds = array<i64: 16, 1>}]} {
    %c0_i32 = arith.constant 0 : i32
    %0 = arith.cmpi eq, %arg1, %c0_i32 : i32
    %1 = arith.extui %0 : i1 to i32
    %c0_i32_0 = arith.constant 0 : i32
    %2 = arith.cmpi ne, %1, %c0_i32_0 : i32
    scf.if %2 {
      %cst_20 = arith.constant 0.000000e+00 : f32
      %57 = vector.broadcast %cst_20 : f32 to vector<1x8x3xf32>
      %c0_21 = arith.constant 0 : index
      %c0_22 = arith.constant 0 : index
      %c0_23 = arith.constant 0 : index
      %58 = vector.load %arg5[%c0_21, %c0_22, %c0_23] : memref<1x8x3xf32, #tpu.memory_space<vmem>>, vector<1x8x3xf32>
      tpu.vector_store %arg5[%c0_21, %c0_22, %c0_23], %57 {strides = array<i32>} : memref<1x8x3xf32, #tpu.memory_space<vmem>>, vector<1x8x3xf32>,
    } else {
    }
    %c1_i32 = arith.constant 1 : i32
    %3 = arith.muli %arg0, %c1_i32 : i32
    %4 = arith.addi %3, %arg1 : i32
    %c0 = arith.constant 0 : index
    %c0_1 = arith.constant 0 : index
    %5 = vector.load %arg2[%c0, %c0_1] : memref<16x8xf32, #tpu.memory_space<vmem>>, vector<16x8xf32>
    %c0_2 = arith.constant 0 : index
    %c0_3 = arith.constant 0 : index
    %6 = vector.load %arg3[%c0_2, %c0_3] : memref<16x1xi32, #tpu.memory_space<vmem>>, vector<16x1xi32>
    %7 = tpu.iota {dimensions = array<i32: 0>} : vector<16x1xi32>
    %c16_i32 = arith.constant 16 : i32
    %8 = arith.muli %4, %c16_i32 : i32
    %9 = vector.broadcast %8 : i32 to vector<16x1xi32>
    %10 = arith.addi %7, %9 : vector<16x1xi32>
    %c16_i32_4 = arith.constant 16 : i32
    %11 = vector.broadcast %c16_i32_4 : i32 to vector<16x1xi32>
    %12 = arith.cmpi slt, %10, %11 : vector<16x1xi32>
    %13 = arith.extui %12 : vector<16x1xi1> to vector<16x1xi32>
    %14 = arith.sitofp %13 : vector<16x1xi32> to vector<16x1xf32>
    %cst = arith.constant 0.000000e+00 : f32
    %15 = vector.shape_cast %12 : vector<16x1xi1> to vector<16x1xi1>
    %16 = vector.broadcast %15 : vector<16x1xi1> to vector<16x8xi1>
    %17 = vector.broadcast %cst : f32 to vector<16x8xf32>
    %18 = arith.select %16, %5, %17 : vector<16x8xi1>, vector<16x8xf32>
    %19 = tpu.iota {dimensions = array<i32: 1>} : vector<16x8xi32>
    %20 = vector.broadcast %6 : vector<16x1xi32> to vector<16x8xi32>
    %21 = arith.cmpi eq, %19, %20 : vector<16x8xi32>
    %22 = arith.extui %21 : vector<16x8xi1> to vector<16x8xi32>
    %23 = arith.sitofp %22 : vector<16x8xi32> to vector<16x8xf32>
    %cst_5 = arith.constant dense<0xFF800000> : vector<16xf32>
    %24 = vector.multi_reduction <maximumf>, %18, %cst_5 [1] : vector<16x8xf32> to vector<16xf32>
    %25 = vector.shape_cast %24 : vector<16xf32> to vector<16x1xf32>
    %26 = vector.broadcast %25 : vector<16x1xf32> to vector<16x8xf32>
    %27 = arith.subf %18, %26 : vector<16x8xf32>
    %28 = math.exp %27 : vector<16x8xf32>
    %cst_6 = arith.constant dense<0.000000e+00> : vector<16xf32>
    %29 = vector.multi_reduction <add>, %28, %cst_6 [1] : vector<16x8xf32> to vector<16xf32>
    %30 = vector.shape_cast %29 : vector<16xf32> to vector<16x1xf32>
    %31 = math.log %30 : vector<16x1xf32>
    %32 = arith.mulf %23, %18 : vector<16x8xf32>
    %cst_7 = arith.constant dense<0.000000e+00> : vector<16xf32>
    %33 = vector.multi_reduction <add>, %32, %cst_7 [1] : vector<16x8xf32> to vector<16xf32>
    %34 = vector.shape_cast %33 : vector<16xf32> to vector<16x1xf32>
    %35 = arith.addf %25, %31 : vector<16x1xf32>
    %36 = arith.subf %35, %34 : vector<16x1xf32>
    %37 = arith.mulf %28, %27 : vector<16x8xf32>
    %cst_8 = arith.constant dense<0.000000e+00> : vector<16xf32>
    %38 = vector.multi_reduction <add>, %37, %cst_8 [1] : vector<16x8xf32> to vector<16xf32>
    %39 = vector.shape_cast %38 : vector<16xf32> to vector<16x1xf32>
    %40 = arith.divf %39, %30 : vector<16x1xf32>
    %41 = arith.subf %31, %40 : vector<16x1xf32>
    %c0_9 = arith.constant 0 : index
    %c0_10 = arith.constant 0 : index
    %42 = vector.load %arg6[%c0_9, %c0_10] : memref<16x1xf32, #tpu.memory_space<vmem>>, vector<16x1xf32>
    tpu.vector_store %arg6[%c0_9, %c0_10], %36 {strides = array<i32>} : memref<16x1xf32, #tpu.memory_space<vmem>>, vector<16x1xf32>,
    %43 = arith.mulf %36, %14 : vector<16x1xf32>
    %44 = arith.mulf %41, %14 : vector<16x1xf32>
    %45 = tpu.concatenate %14, %43, %44 in 1 : vector<16x1xf32>, vector<16x1xf32>, vector<16x1xf32> -> vector<16x3xf32>
    %46 = tpu.iota {dimensions = array<i32: 0>} : vector<8x16xi32>
    %c0_11 = arith.constant 0 : index
    %c0_12 = arith.constant 0 : index
    %47 = vector.load %arg4[%c0_11, %c0_12] : memref<1x16xi32, #tpu.memory_space<vmem>>, vector<1x16xi32>
    %48 = vector.broadcast %47 : vector<1x16xi32> to vector<8x16xi32>
    %49 = arith.cmpi eq, %46, %48 : vector<8x16xi32>
    %50 = arith.extui %49 : vector<8x16xi1> to vector<8x16xi32>
    %51 = arith.sitofp %50 : vector<8x16xi32> to vector<8x16xf32>
    %cst_13 = arith.constant dense<0.000000e+00> : vector<8x3xf32>
    %52 = tpu.matmul %51, %45, %cst_13 {dimension_numbers = #tpu.dot_dimension_numbers<[1], [0], [0], [1], [0, 0, 1, 1], [], []>} : vector<8x16xf32>, vector<16x3xf32>, vector<8x3xf32> -> vector<8x3xf32>
    %c0_14 = arith.constant 0 : index
    %c0_15 = arith.constant 0 : index
    %c0_16 = arith.constant 0 : index
    %53 = vector.load %arg5[%c0_14, %c0_15, %c0_16] : memref<1x8x3xf32, #tpu.memory_space<vmem>>, vector<1x8x3xf32>
    %54 = vector.shape_cast %52 : vector<8x3xf32> to vector<1x8x3xf32>
    %55 = arith.addf %53, %54 : vector<1x8x3xf32>
    %c0_17 = arith.constant 0 : index
    %c0_18 = arith.constant 0 : index
    %c0_19 = arith.constant 0 : index
    %56 = vector.load %arg5[%c0_17, %c0_18, %c0_19] : memref<1x8x3xf32, #tpu.memory_space<vmem>>, vector<1x8x3xf32>
    tpu.vector_store %arg5[%c0_17, %c0_18, %c0_19], %55 {strides = array<i32>} : memref<1x8x3xf32, #tpu.memory_space<vmem>>, vector<1x8x3xf32>,
    return
  }
  func.func @transform_0(%arg0: i32, %arg1: i32) -> (i32, i32) {
    %c1_i32 = arith.constant 1 : i32
    %0 = arith.muli %arg0, %c1_i32 : i32
    %1 = arith.addi %0, %arg1 : i32
    %c0_i32 = arith.constant 0 : i32
    %c0_i32_0 = arith.constant 0 : i32
    return %1, %c0_i32 : i32, i32
  }
  func.func @transform_1(%arg0: i32, %arg1: i32) -> (i32, i32) {
    %c1_i32 = arith.constant 1 : i32
    %0 = arith.muli %arg0, %c1_i32 : i32
    %1 = arith.addi %0, %arg1 : i32
    %c0_i32 = arith.constant 0 : i32
    %c0_i32_0 = arith.constant 0 : i32
    return %1, %c0_i32 : i32, i32
  }
  func.func @transform_2(%arg0: i32, %arg1: i32) -> (i32, i32) {
    %c1_i32 = arith.constant 1 : i32
    %0 = arith.muli %arg0, %c1_i32 : i32
    %1 = arith.addi %0, %arg1 : i32
    %c0_i32 = arith.constant 0 : i32
    %c0_i32_0 = arith.constant 0 : i32
    return %c0_i32, %1 : i32, i32
  }
  func.func @transform_3(%arg0: i32, %arg1: i32) -> (i32, i32, i32) {
    %c0_i32 = arith.constant 0 : i32
    %c0_i32_0 = arith.constant 0 : i32
    %c0_i32_1 = arith.constant 0 : i32
    return %arg0, %c0_i32, %c0_i32_0 : i32, i32, i32
  }
  func.func @transform_4(%arg0: i32, %arg1: i32) -> (i32, i32) {
    %c1_i32 = arith.constant 1 : i32
    %0 = arith.muli %arg0, %c1_i32 : i32
    %1 = arith.addi %0, %arg1 : i32
    %c0_i32 = arith.constant 0 : i32
    %c0_i32_0 = arith.constant 0 : i32
    return %1, %c0_i32 : i32, i32
  }
}

</mosaic_0001>

<llo_original>
// kernel: tpu_custom_call.1
$region0: #{tpu_custom_call.1}
  #allocation0 [shape = 'u32[]', space=smem, size = 0x4, offset = 0x4, fixed_abs, tag = 'smem constant byte address 0x4 - core index']
  #allocation1 [shape = 'u32[144,128]{1,0:T(1,128)}', space=vmem, size = 0x12000, scoped, tag = 'internal scratch']
  %s0 = inlined_call_operand.vmem [shape: f32[16,8], index: 0, kind: input, shape index: {}]
  %s1 = inlined_call_operand.vmem [shape: s32[16,1], index: 1, kind: input, shape index: {}]
  %s2 = inlined_call_operand.vmem [shape: s32[1,16], index: 2, kind: input, shape index: {}]
  %s3 = inlined_call_operand.vmem [shape: f32[1,3,8], index: 3, kind: output, shape index: {0}]
  %s4 = inlined_call_operand.vmem [shape: f32[16,1], index: 4, kind: output, shape index: {1}]
  %5 = xla_tuple %s3, %s4
  %s6 = sld [smem:[#allocation0]]
  $region34: #{tpu_custom_call.1} parent=0
    _
  %s8 = ssub.s32 1, %s6
  %s9 = scalar_select 0, %s8, %s6
  // Predicated region
  $region2: #{tpu_custom_call.1} parent=0 // pred_check
    _
  $region3: #{tpu_custom_call.1} parent=0 // pred_check_branch
    %11 = sbr.rel (0) target = $region5
  $region4: #{tpu_custom_call.1} parent=0 // pred_region
    %s12 = sadd.s32 0, 0
    %s13 = smul.u32 2, %s12
    %p14 = scmp.lt.s32.totalorder %s13, 1
    %s15 = scalar_select %p14, %s13, 1
    %s16 = smul.addr %s15, 8
    %s17 = scalar_lea.vmem %s0, %s16
    %s18 = sadd.s32 0, 0
    %s19 = smul.u32 2, %s18
  $region5: #{tpu_custom_call.1} parent=0 // pred_fallthru
    _
  // Predicated region
  $region6: #{tpu_custom_call.1} parent=0 // pred_check
    _
  $region7: #{tpu_custom_call.1} parent=0 // pred_check_branch
    %21 = sbr.rel (0) target = $region9
  $region8: #{tpu_custom_call.1} parent=0 // pred_region
    %s22 = sadd.s32 0, 0
    %s23 = smul.u32 2, %s22
    %p24 = scmp.lt.s32.totalorder %s23, 1
    %s25 = scalar_select %p24, %s23, 1
    %s26 = smul.addr %s25, 8
    %s27 = scalar_lea.vmem %s1, %s26
    %s28 = sadd.s32 0, 0
    %s29 = smul.u32 2, %s28
  $region9: #{tpu_custom_call.1} parent=0 // pred_fallthru
    _
  // Predicated region
  $region10: #{tpu_custom_call.1} parent=0 // pred_check
    _
  $region11: #{tpu_custom_call.1} parent=0 // pred_check_branch
    %31 = sbr.rel (0) target = $region13
  $region12: #{tpu_custom_call.1} parent=0 // pred_region
    %s32 = sadd.s32 0, 0
    %p33 = scmp.lt.s32.totalorder %s32, 0
    %s34 = scalar_select %p33, %s32, 0
    %s35 = scalar_lea.vmem %s2, %s34
    %s36 = sadd.s32 0, 0
  $region13: #{tpu_custom_call.1} parent=0 // pred_fallthru
    _
  %s37 = sadd.s32 0, 0
  %s38 = smul.u32 2, %s37
  %p39 = scmp.lt.s32.totalorder %s38, 1
  %s40 = scalar_select %p39, %s38, 1
  %s41 = smul.addr %s40, 8
  %s42 = scalar_lea.vmem %s0, %s41
  %s43 = sadd.s32 0, 0
  %s44 = smul.u32 2, %s43
  %p45 = scmp.lt.s32.totalorder %s44, 1
  %s46 = scalar_select %p45, %s44, 1
  %s47 = smul.addr %s46, 8
  %s48 = scalar_lea.vmem %s1, %s47
  %s49 = sadd.s32 0, 0
  %p50 = scmp.lt.s32.totalorder %s49, 0
  %s51 = scalar_select %p50, %s49, 0
  %s52 = scalar_lea.vmem %s2, %s51
  %s53 = sadd.s32 0, 0
  %s54 = smul.u32 2, %s53
  %p55 = scmp.lt.s32.totalorder %s54, 1
  %s56 = scalar_select %p55, %s54, 1
  %s57 = smul.addr %s56, 8
  %s58 = scalar_lea.vmem %s4, %s57
  %s59 = sadd.s32 0, 0
  %s60 = smul.u32 2, %s59
  %p61 = scmp.lt.s32.totalorder %s60, 1
  %s62 = scalar_select %p61, %s60, 1
  %s63 = smul.addr %s62, 8
  %s64 = scalar_lea.vmem %s0, %s63
  %s65 = sadd.s32 0, 0
  %s66 = smul.u32 2, %s65
  %s67 = sadd.s32 0, 0
  %s68 = smul.u32 2, %s67
  %p69 = scmp.lt.s32.totalorder %s68, 1
  %s70 = scalar_select %p69, %s68, 1
  %s71 = smul.addr %s70, 8
  %s72 = scalar_lea.vmem %s1, %s71
  %s73 = sadd.s32 0, 0
  %s74 = smul.u32 2, %s73
  %s75 = sadd.s32 0, 0
  %p76 = scmp.lt.s32.totalorder %s75, 0
  %s77 = scalar_select %p76, %s75, 0
  %s78 = scalar_lea.vmem %s2, %s77
  %s79 = sadd.s32 0, 0
  %s80 = sadd.s32 0, 0
  %s81 = smul.u32 2, %s80
  %p82 = scmp.lt.s32.totalorder %s81, 1
  %s83 = scalar_select %p82, %s81, 1
  %s84 = smul.addr %s83, 8
  %s85 = scalar_lea.vmem %s4, %s84
  %s86 = sadd.s32 0, 0
  %s87 = smul.u32 2, %s86
  %p88 = scmp.eq.s32.totalorder 0, 0
  // Predicated region
  $region14: #{tpu_custom_call.1} parent=0 // pred_check
    %p89 = pneg %p88
  $region15: #{tpu_custom_call.1} parent=0 // pred_check_branch
    %91 = sbr.rel (%p89) target = $region17
  $region16: #{tpu_custom_call.1} parent=0 // pred_region
    %vm92 = vcmask 59392
    %93 = vst.msk [vmem:[%s3] sm:$0x7] %vm92, 0.0
  $region17: #{tpu_custom_call.1} parent=0 // pred_fallthru
    _
  %s94 = sadd.s32 0, 0
  %v95 = vld [vmem:[%s64] sm:$0xff]
  %v96 = vld [vmem:[%s64 + $0x8] sm:$0xff]
  %v97 = vld [vmem:[%s72] sm:$0xff]
  %v98 = vld [vmem:[%s72 + $0x8] sm:$0xff]
  %v99 = vlaneseq
  %v100 = vshrl.u32 %v99, 7
  %v101 = vadd.s32 %v100, 8
  %s102 = smul.u32 %s94, 16
  %v103 = vstv %s102
  %v104 = vadd.s32 %v100, %v103
  %v105 = vadd.s32 %v101, %v103
  %vm106 = vcmp.lt.s32.totalorder %v104, 16
  %vm107 = vcmp.lt.s32.totalorder %v105, 16
  %v108 = vsel %vm106, 1, 0
  %v109 = vsel %vm107, 1, 0
  %v110 = vcvt.s32.f32 %v108
  %v111 = vcvt.s32.f32 %v109
  %vm112 = vcmp.eq.s32.totalorder %v108, 1
  %vm113 = vcmp.eq.s32.totalorder %v109, 1
  %v114 = vsel %vm112, %v95, 0.0
  %v115 = vsel %vm113, %v96, 0.0
  %v116 = vlaneseq
  %v117 = vand.u32 %v116, 127
  %118 = vset.pattern.permute.xlu0 0
  %119 = vperm.xlu0 %118, %v97
  %v120 = vpop.permute.xlu0 %119
  %121 = vset.pattern.permute.xlu0 0
  %122 = vperm.xlu0 %121, %v98
  %v123 = vpop.permute.xlu0 %122
  %vm124 = vcmp.eq.s32.totalorder %v117, %v120
  %vm125 = vcmp.eq.s32.totalorder %v117, %v123
  %v126 = vsel %vm124, 1, 0
  %v127 = vsel %vm125, 1, 0
  %v128 = vcvt.s32.f32 %v126
  %v129 = vcvt.s32.f32 %v127
  %vm130 = vcmask 64512
  %v131 = vsel %vm130, %v114, -inf
  %132 = vmax.xlane.f32.xlu0 %v131
  %v133 = vpop.xlane.xlu0 %132
  %v134 = vsel %vm130, %v115, -inf
  %135 = vmax.xlane.f32.xlu0 %v134
  %v136 = vpop.xlane.xlu0 %135
  %v137 = vsub.f32 %v114, %v133
  %v138 = vsub.f32 %v115, %v136
  %v139 = vmul.f32 %v137, 1.442695
  %v140 = vpow.pop %v139
  %v141 = vmul.f32 %v138, 1.442695
  %v142 = vpow.pop %v141
  %v143 = vsel %vm130, %v140, 0.0
  %144 = vadd.xlane.f32.xlu0 %v143
  %v145 = vpop.xlane.xlu0 %144
  %v146 = vsel %vm130, %v142, 0.0
  %147 = vadd.xlane.f32.xlu0 %v146
  %v148 = vpop.xlane.xlu0 %147
  %v149 = vlog2.pop %v145
  %v150 = vmul.f32 %v149, 0.6931472
  %v151 = vlog2.pop %v148
  %v152 = vmul.f32 %v151, 0.6931472
  %v153 = vmul.f32 %v128, %v114
  %v154 = vmul.f32 %v129, %v115
  %v155 = vsel %vm130, %v153, 0.0
  %156 = vadd.xlane.f32.xlu0 %v155
  %v157 = vpop.xlane.xlu0 %156
  %v158 = vsel %vm130, %v154, 0.0
  %159 = vadd.xlane.f32.xlu0 %v158
  %v160 = vpop.xlane.xlu0 %159
  %v161 = vadd.f32 %v133, %v150
  %v162 = vadd.f32 %v136, %v152
  %v163 = vsub.f32 %v161, %v157
  %v164 = vsub.f32 %v162, %v160
  %v165 = vmul.f32 %v140, %v137
  %v166 = vmul.f32 %v142, %v138
  %v167 = vsel %vm130, %v165, 0.0
  %168 = vadd.xlane.f32.xlu0 %v167
  %v169 = vpop.xlane.xlu0 %168
  %v170 = vsel %vm130, %v166, 0.0
  %171 = vadd.xlane.f32.xlu0 %v170
  %v172 = vpop.xlane.xlu0 %171
  %v173 = vrcp.pop %v145
  %v174 = vmul.f32 %v169, %v173
  %v175 = vrcp.pop %v148
  %v176 = vmul.f32 %v172, %v175
  %v177 = vsub.f32 %v150, %v174
  %v178 = vsub.f32 %v152, %v176
  %vm179 = vcmask 7168
  %180 = vst.msk [vmem:[%s85] sm:$0xff] %vm179, %v163
  %181 = vst.msk [vmem:[%s85 + $0x8] sm:$0xff] %vm179, %v164
  %v182 = vmul.f32 %v163, %v110
  %v183 = vmul.f32 %v164, %v111
  %v184 = vmul.f32 %v177, %v110
  %v185 = vmul.f32 %v178, %v111
  %v186 = vsel %vm179, %v110, %v182
  %v187 = vsel %vm179, %v111, %v183
  %vm188 = vcmask 15360
  %v189 = vsel %vm188, %v186, %v184
  %v190 = vsel %vm188, %v187, %v185
  %191 = vxpose.xlu0.b32.start [1/16] %v189, 128
  %192 = vxpose.xlu0.b32.cont [2/16] %v190, 128
  %193 = vxpose.xlu0.b32.cont [3/16] 0.0, 128
  %194 = vxpose.xlu0.b32.cont [4/16] 0.0, 128
  %195 = vxpose.xlu0.b32.cont [5/16] 0.0, 128
  %196 = vxpose.xlu0.b32.cont [6/16] 0.0, 128
  %197 = vxpose.xlu0.b32.cont [7/16] 0.0, 128
  %198 = vxpose.xlu0.b32.cont [8/16] 0.0, 128
  %199 = vxpose.xlu0.b32.cont [9/16] 0.0, 128
  %200 = vxpose.xlu0.b32.cont [10/16] 0.0, 128
  %201 = vxpose.xlu0.b32.cont [11/16] 0.0, 128
  %202 = vxpose.xlu0.b32.cont [12/16] 0.0, 128
  %203 = vxpose.xlu0.b32.cont [13/16] 0.0, 128
  %204 = vxpose.xlu0.b32.cont [14/16] 0.0, 128
  %205 = vxpose.xlu0.b32.cont [15/16] 0.0, 128
  %206 = vxpose.xlu0.b32.end [16/16] 0.0, 128
  %v207 = vpop.trf.xlu0
  %v208 = vpop.trf.xlu0
  %v209 = vpop.trf.xlu0
  %v210 = vpop.trf.xlu0
  %v211 = vpop.trf.xlu0
  %v212 = vpop.trf.xlu0
  %v213 = vpop.trf.xlu0
  %v214 = vpop.trf.xlu0
  %v215 = vpop.trf.xlu0
  %v216 = vpop.trf.xlu0
  %v217 = vpop.trf.xlu0
  %v218 = vpop.trf.xlu0
  %v219 = vpop.trf.xlu0
  %v220 = vpop.trf.xlu0
  %v221 = vpop.trf.xlu0
  %v222 = vpop.trf.xlu0
  %vm223 = vcmask 130048
  %v225 = vsel %vm223, %v207, 0
  %227 = vmatprep.subr.mxu0 0.0
  %228 = vmatpush1.msra.mxu0 %v128
  %229 = vmatprep.subr.mxu0 0.0
  %230 = vmatpush1.msra.mxu0 %v129
  %231 = vmatprep.subr.mxu0 0.0
  %232 = vmatpush1.msra.mxu0 0.0
  %233 = vmatprep.subr.mxu0 0.0
  %234 = vmatpush1.msra.mxu0 0.0
  %235 = vmatprep.subr.mxu0 0.0
  %236 = vmatpush1.msra.mxu0 0.0
  %237 = vmatprep.subr.mxu0 0.0
  %238 = vmatpush1.msra.mxu0 0.0
  %239 = vmatprep.subr.mxu0 0.0
  %240 = vmatpush1.msra.mxu0 0.0
  %241 = vmatprep.subr.mxu0 0.0
  %242 = vmatpush1.msra.mxu0 0.0
  %243 = vmatprep.subr.mxu0 0.0
  %244 = vmatpush1.msra.mxu0 0.0
  %245 = vmatprep.subr.mxu0 0.0
  %246 = vmatpush1.msra.mxu0 0.0
  %247 = vmatprep.subr.mxu0 0.0
  %248 = vmatpush1.msra.mxu0 0.0
  %249 = vmatprep.subr.mxu0 0.0
  %250 = vmatpush1.msra.mxu0 0.0
  %251 = vmatprep.subr.mxu0 0.0
  %252 = vmatpush1.msra.mxu0 0.0
  %253 = vmatprep.subr.mxu0 0.0
  %254 = vmatpush1.msra.mxu0 0.0
  %255 = vmatprep.subr.mxu0 0.0
  %256 = vmatpush1.msra.mxu0 0.0
  %257 = vmatprep.subr.mxu0 0.0
  %258 = vmatpush1.msra.mxu0 0.0
  %259 = vmatprep.subr.mxu0 0.0
  %260 = vmatpush1.msra.mxu0 0.0
  %261 = vmatprep.subr.mxu0 0.0
  %262 = vmatpush1.msra.mxu0 0.0
  %263 = vmatprep.subr.mxu0 0.0
  %264 = vmatpush1.msra.mxu0 0.0
  %265 = vmatprep.subr.mxu0 0.0
  %266 = vmatpush1.msra.mxu0 0.0
  %267 = vmatprep.subr.mxu0 0.0
  %268 = vmatpush1.msra.mxu0 0.0
  %269 = vmatprep.subr.mxu0 0.0
  %270 = vmatpush1.msra.mxu0 0.0
  %271 = vmatprep.subr.mxu0 0.0
  %272 = vmatpush1.msra.mxu0 0.0
  %273 = vmatprep.subr.mxu0 0.0
  %274 = vmatpush1.msra.mxu0 0.0
  %275 = vmatprep.subr.mxu0 0.0
  %276 = vmatpush1.msra.mxu0 0.0
  %277 = vmatprep.subr.mxu0 0.0
  %278 = vmatpush1.msra.mxu0 0.0
  %279 = vmatprep.subr.mxu0 0.0
  %280 = vmatpush1.msra.mxu0 0.0
  %281 = vmatprep.subr.mxu0 0.0
  %282 = vmatpush1.msra.mxu0 0.0
  %283 = vmatprep.subr.mxu0 0.0
  %284 = vmatpush1.msra.mxu0 0.0
  %285 = vmatprep.subr.mxu0 0.0
  %286 = vmatpush1.msra.mxu0 0.0
  %287 = vmatprep.subr.mxu0 0.0
  %288 = vmatpush1.msra.mxu0 0.0
  %289 = vmatprep.subr.mxu0 0.0
  %290 = vmatpush1.msra.mxu0 0.0
  %291 = vmatprep.mubr.f32.mxu0 0.0
  %292 = vmatmul.mubr.f32.gmra.mrb[0].mxu0 %v225
  %v293 = vpop.f32.mrb[0].mxu0
  %v294 = vadd.f32 0.0, %v293
  %v295 = vpop.f32.mrb[0].mxu0
  %296 = vdwg.mxu0
  %v297 = vld [vmem:[%s3] sm:$0x7]
  %v298 = vadd.f32 %v297, %v294
  %vm299 = vcmask 59392
  %300 = vst.msk [vmem:[%s3] sm:$0x7] %vm299, %v298
  %s301 = sadd.s32 0, 0
  %s302 = smul.u32 2, %s301
  %p303 = scmp.lt.s32.totalorder %s302, 1
  %s304 = scalar_select %p303, %s302, 1
  %s305 = smul.addr %s304, 8
  %s306 = scalar_lea.vmem %s4, %s305
  // Predicated region
  $region18: #{tpu_custom_call.1} parent=0 // pred_check
    _
  $region19: #{tpu_custom_call.1} parent=0 // pred_check_branch
    %308 = sbr.rel (0) target = $region21
  $region20: #{tpu_custom_call.1} parent=0 // pred_region
    _
  $region21: #{tpu_custom_call.1} parent=0 // pred_fallthru
    _
  // Predicated region
  $region22: #{tpu_custom_call.1} parent=0 // pred_check
    _
  $region23: #{tpu_custom_call.1} parent=0 // pred_check_branch
    %310 = sbr.rel (0) target = $region25
  $region24: #{tpu_custom_call.1} parent=0 // pred_region
    %s311 = sadd.s32 0, 0
    %s312 = smul.u32 2, %s311
  $region25: #{tpu_custom_call.1} parent=0 // pred_fallthru
    _
  // Predicated region
  $region26: #{tpu_custom_call.1} parent=0 // pred_check
    _
  $region27: #{tpu_custom_call.1} parent=0 // pred_check_branch
    %314 = sbr.rel (0) target = $region29
  $region28: #{tpu_custom_call.1} parent=0 // pred_region
    _
  $region29: #{tpu_custom_call.1} parent=0 // pred_fallthru
    _
  // Predicated region
  $region30: #{tpu_custom_call.1} parent=0 // pred_check
    _
  $region31: #{tpu_custom_call.1} parent=0 // pred_check_branch
    %316 = sbr.rel (0) target = $region33
  $region32: #{tpu_custom_call.1} parent=0 // pred_region
    %s317 = sadd.s32 0, 0
    %s318 = smul.u32 2, %s317
    %p319 = scmp.lt.s32.totalorder %s318, 1
    %s320 = scalar_select %p319, %s318, 1
    %s321 = smul.addr %s320, 8
    %s322 = scalar_lea.vmem %s4, %s321
  $region33: #{tpu_custom_call.1} parent=0 // pred_fallthru
    _

// kernel: tpu_custom_call.1
$region0: #{tpu_custom_call.1}
  #allocation0 [shape = 'u32[]', space=smem, size = 0x4, offset = 0x4, fixed_abs, tag = 'smem constant byte address 0x4 - core index']
  #allocation1 [shape = 'u32[144,128]{1,0:T(1,128)}', space=vmem, size = 0x12000, scoped, tag = 'internal scratch']
  %s0 = inlined_call_operand.vmem [shape: f32[16,8], index: 0, kind: input, shape index: {}]
  %s1 = inlined_call_operand.vmem [shape: s32[16,1], index: 1, kind: input, shape index: {}]
  %s2 = inlined_call_operand.vmem [shape: s32[1,16], index: 2, kind: input, shape index: {}]
  %s3 = inlined_call_operand.vmem [shape: f32[1,8,3], index: 3, kind: output, shape index: {0}]
  %s4 = inlined_call_operand.vmem [shape: f32[16,1], index: 4, kind: output, shape index: {1}]
  %5 = xla_tuple %s3, %s4
  %s6 = sld [smem:[#allocation0]]
  $region34: #{tpu_custom_call.1} parent=0
    _
  %s8 = ssub.s32 1, %s6
  %s9 = scalar_select 0, %s8, %s6
  // Predicated region
  $region2: #{tpu_custom_call.1} parent=0 // pred_check
    _
  $region3: #{tpu_custom_call.1} parent=0 // pred_check_branch
    %11 = sbr.rel (0) target = $region5
  $region4: #{tpu_custom_call.1} parent=0 // pred_region
    %s12 = sadd.s32 0, 0
    %s13 = smul.u32 2, %s12
    %p14 = scmp.lt.s32.totalorder %s13, 1
    %s15 = scalar_select %p14, %s13, 1
    %s16 = smul.addr %s15, 8
    %s17 = scalar_lea.vmem %s0, %s16
    %s18 = sadd.s32 0, 0
    %s19 = smul.u32 2, %s18
  $region5: #{tpu_custom_call.1} parent=0 // pred_fallthru
    _
  // Predicated region
  $region6: #{tpu_custom_call.1} parent=0 // pred_check
    _
  $region7: #{tpu_custom_call.1} parent=0 // pred_check_branch
    %21 = sbr.rel (0) target = $region9
  $region8: #{tpu_custom_call.1} parent=0 // pred_region
    %s22 = sadd.s32 0, 0
    %s23 = smul.u32 2, %s22
    %p24 = scmp.lt.s32.totalorder %s23, 1
    %s25 = scalar_select %p24, %s23, 1
    %s26 = smul.addr %s25, 8
    %s27 = scalar_lea.vmem %s1, %s26
    %s28 = sadd.s32 0, 0
    %s29 = smul.u32 2, %s28
  $region9: #{tpu_custom_call.1} parent=0 // pred_fallthru
    _
  // Predicated region
  $region10: #{tpu_custom_call.1} parent=0 // pred_check
    _
  $region11: #{tpu_custom_call.1} parent=0 // pred_check_branch
    %31 = sbr.rel (0) target = $region13
  $region12: #{tpu_custom_call.1} parent=0 // pred_region
    %s32 = sadd.s32 0, 0
    %p33 = scmp.lt.s32.totalorder %s32, 0
    %s34 = scalar_select %p33, %s32, 0
    %s35 = scalar_lea.vmem %s2, %s34
    %s36 = sadd.s32 0, 0
  $region13: #{tpu_custom_call.1} parent=0 // pred_fallthru
    _
  %s37 = sadd.s32 0, 0
  %s38 = smul.u32 2, %s37
  %p39 = scmp.lt.s32.totalorder %s38, 1
  %s40 = scalar_select %p39, %s38, 1
  %s41 = smul.addr %s40, 8
  %s42 = scalar_lea.vmem %s0, %s41
  %s43 = sadd.s32 0, 0
  %s44 = smul.u32 2, %s43
  %p45 = scmp.lt.s32.totalorder %s44, 1
  %s46 = scalar_select %p45, %s44, 1
  %s47 = smul.addr %s46, 8
  %s48 = scalar_lea.vmem %s1, %s47
  %s49 = sadd.s32 0, 0
  %p50 = scmp.lt.s32.totalorder %s49, 0
  %s51 = scalar_select %p50, %s49, 0
  %s52 = scalar_lea.vmem %s2, %s51
  %s53 = sadd.s32 0, 0
  %s54 = smul.u32 2, %s53
  %p55 = scmp.lt.s32.totalorder %s54, 1
  %s56 = scalar_select %p55, %s54, 1
  %s57 = smul.addr %s56, 8
  %s58 = scalar_lea.vmem %s4, %s57
  %s59 = sadd.s32 0, 0
  %s60 = smul.u32 2, %s59
  %p61 = scmp.lt.s32.totalorder %s60, 1
  %s62 = scalar_select %p61, %s60, 1
  %s63 = smul.addr %s62, 8
  %s64 = scalar_lea.vmem %s0, %s63
  %s65 = sadd.s32 0, 0
  %s66 = smul.u32 2, %s65
  %s67 = sadd.s32 0, 0
  %s68 = smul.u32 2, %s67
  %p69 = scmp.lt.s32.totalorder %s68, 1
  %s70 = scalar_select %p69, %s68, 1
  %s71 = smul.addr %s70, 8
  %s72 = scalar_lea.vmem %s1, %s71
  %s73 = sadd.s32 0, 0
  %s74 = smul.u32 2, %s73
  %s75 = sadd.s32 0, 0
  %p76 = scmp.lt.s32.totalorder %s75, 0
  %s77 = scalar_select %p76, %s75, 0
  %s78 = scalar_lea.vmem %s2, %s77
  %s79 = sadd.s32 0, 0
  %s80 = sadd.s32 0, 0
  %s81 = smul.u32 2, %s80
  %p82 = scmp.lt.s32.totalorder %s81, 1
  %s83 = scalar_select %p82, %s81, 1
  %s84 = smul.addr %s83, 8
  %s85 = scalar_lea.vmem %s4, %s84
  %s86 = sadd.s32 0, 0
  %s87 = smul.u32 2, %s86
  %p88 = scmp.eq.s32.totalorder 0, 0
  // Predicated region
  $region14: #{tpu_custom_call.1} parent=0 // pred_check
    %p89 = pneg %p88
  $region15: #{tpu_custom_call.1} parent=0 // pred_check_branch
    %91 = sbr.rel (%p89) target = $region17
  $region16: #{tpu_custom_call.1} parent=0 // pred_region
    %vm92 = vcmask 23552
    %93 = vst.msk [vmem:[%s3] sm:$0xff] %vm92, 0.0
  $region17: #{tpu_custom_call.1} parent=0 // pred_fallthru
    _
  %s94 = sadd.s32 0, 0
  %v95 = vld [vmem:[%s64] sm:$0xff]
  %v96 = vld [vmem:[%s64 + $0x8] sm:$0xff]
  %v97 = vld [vmem:[%s72] sm:$0xff]
  %v98 = vld [vmem:[%s72 + $0x8] sm:$0xff]
  %v99 = vlaneseq
  %v100 = vshrl.u32 %v99, 7
  %v101 = vadd.s32 %v100, 8
  %s102 = smul.u32 %s94, 16
  %v103 = vstv %s102
  %v104 = vadd.s32 %v100, %v103
  %v105 = vadd.s32 %v101, %v103
  %vm106 = vcmp.lt.s32.totalorder %v104, 16
  %vm107 = vcmp.lt.s32.totalorder %v105, 16
  %v108 = vsel %vm106, 1, 0
  %v109 = vsel %vm107, 1, 0
  %v110 = vcvt.s32.f32 %v108
  %v111 = vcvt.s32.f32 %v109
  %vm112 = vcmp.eq.s32.totalorder %v108, 1
  %vm113 = vcmp.eq.s32.totalorder %v109, 1
  %v114 = vsel %vm112, %v95, 0.0
  %v115 = vsel %vm113, %v96, 0.0
  %v116 = vlaneseq
  %v117 = vand.u32 %v116, 127
  %118 = vset.pattern.permute.xlu0 0
  %119 = vperm.xlu0 %118, %v97
  %v120 = vpop.permute.xlu0 %119
  %121 = vset.pattern.permute.xlu0 0
  %122 = vperm.xlu0 %121, %v98
  %v123 = vpop.permute.xlu0 %122
  %vm124 = vcmp.eq.s32.totalorder %v117, %v120
  %vm125 = vcmp.eq.s32.totalorder %v117, %v123
  %v126 = vsel %vm124, 1, 0
  %v127 = vsel %vm125, 1, 0
  %v128 = vcvt.s32.f32 %v126
  %v129 = vcvt.s32.f32 %v127
  %vm130 = vcmask 64512
  %v131 = vsel %vm130, %v114, -inf
  %132 = vmax.xlane.f32.xlu0 %v131
  %v133 = vpop.xlane.xlu0 %132
  %v134 = vsel %vm130, %v115, -inf
  %135 = vmax.xlane.f32.xlu0 %v134
  %v136 = vpop.xlane.xlu0 %135
  %v137 = vsub.f32 %v114, %v133
  %v138 = vsub.f32 %v115, %v136
  %v139 = vmul.f32 %v137, 1.442695
  %v140 = vpow.pop %v139
  %v141 = vmul.f32 %v138, 1.442695
  %v142 = vpow.pop %v141
  %v143 = vsel %vm130, %v140, 0.0
  %144 = vadd.xlane.f32.xlu0 %v143
  %v145 = vpop.xlane.xlu0 %144
  %v146 = vsel %vm130, %v142, 0.0
  %147 = vadd.xlane.f32.xlu0 %v146
  %v148 = vpop.xlane.xlu0 %147
  %v149 = vlog2.pop %v145
  %v150 = vmul.f32 %v149, 0.6931472
  %v151 = vlog2.pop %v148
  %v152 = vmul.f32 %v151, 0.6931472
  %v153 = vmul.f32 %v128, %v114
  %v154 = vmul.f32 %v129, %v115
  %v155 = vsel %vm130, %v153, 0.0
  %156 = vadd.xlane.f32.xlu0 %v155
  %v157 = vpop.xlane.xlu0 %156
  %v158 = vsel %vm130, %v154, 0.0
  %159 = vadd.xlane.f32.xlu0 %v158
  %v160 = vpop.xlane.xlu0 %159
  %v161 = vadd.f32 %v133, %v150
  %v162 = vadd.f32 %v136, %v152
  %v163 = vsub.f32 %v161, %v157
  %v164 = vsub.f32 %v162, %v160
  %v165 = vmul.f32 %v140, %v137
  %v166 = vmul.f32 %v142, %v138
  %v167 = vsel %vm130, %v165, 0.0
  %168 = vadd.xlane.f32.xlu0 %v167
  %v169 = vpop.xlane.xlu0 %168
  %v170 = vsel %vm130, %v166, 0.0
  %171 = vadd.xlane.f32.xlu0 %v170
  %v172 = vpop.xlane.xlu0 %171
  %v173 = vrcp.pop %v145
  %v174 = vmul.f32 %v169, %v173
  %v175 = vrcp.pop %v148
  %v176 = vmul.f32 %v172, %v175
  %v177 = vsub.f32 %v150, %v174
  %v178 = vsub.f32 %v152, %v176
  %vm179 = vcmask 7168
  %180 = vst.msk [vmem:[%s85] sm:$0xff] %vm179, %v163
  %181 = vst.msk [vmem:[%s85 + $0x8] sm:$0xff] %vm179, %v164
  %v182 = vmul.f32 %v163, %v110
  %v183 = vmul.f32 %v164, %v111
  %v184 = vmul.f32 %v177, %v110
  %v185 = vmul.f32 %v178, %v111
  %v186 = vsel %vm179, %v110, %v182
  %v187 = vsel %vm179, %v111, %v183
  %vm188 = vcmask 15360
  %v189 = vsel %vm188, %v186, %v184
  %v190 = vsel %vm188, %v187, %v185
  %v191 = vld [vmem:[%s78] sm:$0x1]
  %v192 = vlaneseq
  %v193 = vshrl.u32 %v192, 7
  %v194 = vsub.s32 0, %v193
  %v195 = vrot.slane %v191, %v194
  %vm196 = vcmp.eq.s32.totalorder %v100, %v195
  %v197 = vsel %vm196, 1, 0
  %v198 = vcvt.s32.f32 %v197
  %vm199 = vcmask 130048
  %v201 = vsel %vm199, %v198, 0
  %203 = vmatprep.subr.mxu0 0.0
  %204 = vmatpush1.msra.mxu0 %v189
  %205 = vmatprep.subr.mxu0 0.0
  %206 = vmatpush1.msra.mxu0 %v190
  %207 = vmatprep.subr.mxu0 0.0
  %208 = vmatpush1.msra.mxu0 0.0
  %209 = vmatprep.subr.mxu0 0.0
  %210 = vmatpush1.msra.mxu0 0.0
  %211 = vmatprep.subr.mxu0 0.0
  %212 = vmatpush1.msra.mxu0 0.0
  %213 = vmatprep.subr.mxu0 0.0
  %214 = vmatpush1.msra.mxu0 0.0
  %215 = vmatprep.subr.mxu0 0.0
  %216 = vmatpush1.msra.mxu0 0.0
  %217 = vmatprep.subr.mxu0 0.0
  %218 = vmatpush1.msra.mxu0 0.0
  %219 = vmatprep.subr.mxu0 0.0
  %220 = vmatpush1.msra.mxu0 0.0
  %221 = vmatprep.subr.mxu0 0.0
  %222 = vmatpush1.msra.mxu0 0.0
  %223 = vmatprep.subr.mxu0 0.0
  %224 = vmatpush1.msra.mxu0 0.0
  %225 = vmatprep.subr.mxu0 0.0
  %226 = vmatpush1.msra.mxu0 0.0
  %227 = vmatprep.subr.mxu0 0.0
  %228 = vmatpush1.msra.mxu0 0.0
  %229 = vmatprep.subr.mxu0 0.0
  %230 = vmatpush1.msra.mxu0 0.0
  %231 = vmatprep.subr.mxu0 0.0
  %232 = vmatpush1.msra.mxu0 0.0
  %233 = vmatprep.subr.mxu0 0.0
  %234 = vmatpush1.msra.mxu0 0.0
  %235 = vmatprep.subr.mxu0 0.0
  %236 = vmatpush1.msra.mxu0 0.0
  %237 = vmatprep.subr.mxu0 0.0
  %238 = vmatpush1.msra.mxu0 0.0
  %239 = vmatprep.subr.mxu0 0.0
  %240 = vmatpush1.msra.mxu0 0.0
  %241 = vmatprep.subr.mxu0 0.0
  %242 = vmatpush1.msra.mxu0 0.0
  %243 = vmatprep.subr.mxu0 0.0
  %244 = vmatpush1.msra.mxu0 0.0
  %245 = vmatprep.subr.mxu0 0.0
  %246 = vmatpush1.msra.mxu0 0.0
  %247 = vmatprep.subr.mxu0 0.0
  %248 = vmatpush1.msra.mxu0 0.0
  %249 = vmatprep.subr.mxu0 0.0
  %250 = vmatpush1.msra.mxu0 0.0
  %251 = vmatprep.subr.mxu0 0.0
  %252 = vmatpush1.msra.mxu0 0.0
  %253 = vmatprep.subr.mxu0 0.0
  %254 = vmatpush1.msra.mxu0 0.0
  %255 = vmatprep.subr.mxu0 0.0
  %256 = vmatpush1.msra.mxu0 0.0
  %257 = vmatprep.subr.mxu0 0.0
  %258 = vmatpush1.msra.mxu0 0.0
  %259 = vmatprep.subr.mxu0 0.0
  %260 = vmatpush1.msra.mxu0 0.0
  %261 = vmatprep.subr.mxu0 0.0
  %262 = vmatpush1.msra.mxu0 0.0
  %263 = vmatprep.subr.mxu0 0.0
  %264 = vmatpush1.msra.mxu0 0.0
  %265 = vmatprep.subr.mxu0 0.0
  %266 = vmatpush1.msra.mxu0 0.0
  %267 = vmatprep.mubr.f32.mxu0 0.0
  %268 = vmatmul.mubr.f32.gmra.mrb[0].mxu0 %v201
  %v269 = vpop.f32.mrb[0].mxu0
  %v270 = vadd.f32 0.0, %v269
  %v271 = vpop.f32.mrb[0].mxu0
  %272 = vdwg.mxu0
  %v273 = vld [vmem:[%s3] sm:$0xff]
  %v274 = vadd.f32 %v273, %v270
  %vm275 = vcmask 23552
  %276 = vst.msk [vmem:[%s3] sm:$0xff] %vm275, %v274
  %s277 = sadd.s32 0, 0
  %s278 = smul.u32 2, %s277
  %p279 = scmp.lt.s32.totalorder %s278, 1
  %s280 = scalar_select %p279, %s278, 1
  %s281 = smul.addr %s280, 8
  %s282 = scalar_lea.vmem %s4, %s281
  // Predicated region
  $region18: #{tpu_custom_call.1} parent=0 // pred_check
    _
  $region19: #{tpu_custom_call.1} parent=0 // pred_check_branch
    %284 = sbr.rel (0) target = $region21
  $region20: #{tpu_custom_call.1} parent=0 // pred_region
    _
  $region21: #{tpu_custom_call.1} parent=0 // pred_fallthru
    _
  // Predicated region
  $region22: #{tpu_custom_call.1} parent=0 // pred_check
    _
  $region23: #{tpu_custom_call.1} parent=0 // pred_check_branch
    %286 = sbr.rel (0) target = $region25
  $region24: #{tpu_custom_call.1} parent=0 // pred_region
    %s287 = sadd.s32 0, 0
    %s288 = smul.u32 2, %s287
  $region25: #{tpu_custom_call.1} parent=0 // pred_fallthru
    _
  // Predicated region
  $region26: #{tpu_custom_call.1} parent=0 // pred_check
    _
  $region27: #{tpu_custom_call.1} parent=0 // pred_check_branch
    %290 = sbr.rel (0) target = $region29
  $region28: #{tpu_custom_call.1} parent=0 // pred_region
    _
  $region29: #{tpu_custom_call.1} parent=0 // pred_fallthru
    _
  // Predicated region
  $region30: #{tpu_custom_call.1} parent=0 // pred_check
    _
  $region31: #{tpu_custom_call.1} parent=0 // pred_check_branch
    %292 = sbr.rel (0) target = $region33
  $region32: #{tpu_custom_call.1} parent=0 // pred_region
    %s293 = sadd.s32 0, 0
    %s294 = smul.u32 2, %s293
    %p295 = scmp.lt.s32.totalorder %s294, 1
    %s296 = scalar_select %p295, %s294, 1
    %s297 = smul.addr %s296, 8
    %s298 = scalar_lea.vmem %s4, %s297
  $region33: #{tpu_custom_call.1} parent=0 // pred_fallthru
    _

</llo_original>
